<compile_context>
chip_gen: v5e
topology: v5e:2x2
jax: 0.10.0
libtpu: 0.0.40
codegen_flags: <defaults>
</compile_context>

<pallas_src>
import functools

import jax
import jax.numpy as jnp
import numpy as np
from jax import lax
from jax.experimental import pallas as pl
from jax.experimental.pallas import tpu as pltpu


def _round_up(x: int, m: int) -> int:
    return ((x + m - 1) // m) * m


def _l2_normalize(x, eps=1e-12):
    # torch.nn.functional.normalize(x, p=2, dim=-1) == x / max(||x||_2, eps)
    #                                              == x * rsqrt(max(sum(x*x), eps^2))
    ss = jnp.sum(x * x, axis=-1, keepdims=True)
    return x * lax.rsqrt(jnp.maximum(ss, eps * eps))


def distmult_neg_kernel(lhs_ref, negt_ref, out_ref):
    # lhs_ref:  (tq, d)   = norm(query) * rel      (matmul_dtype)
    # negt_ref: (d, tn)   = norm(neg)^T            (matmul_dtype)
    # out_ref:  (tq, tn)  = -(lhs @ negt)          (out_dtype, lane-dense store)
    out_ref[...] = (-jnp.dot(lhs_ref[...], negt_ref[...],
                             preferred_element_type=jnp.float32)
                    ).astype(out_ref.dtype)


def distmult_scores(query_embeds, pos_target_embeds, neg_target_embeds,
                    relation_embeds, *, tq=512, tn=2048,
                    matmul_dtype=jnp.bfloat16, out_dtype=jnp.bfloat16):
    """Returns (pos_scores (Q,) f32, neg_scores (Q, N) out_dtype)."""
    Q, d = query_embeds.shape
    N = neg_target_embeds.shape[0]

    # --- Wrapper-side prep (fused by XLA with the pad/cast copies) ----------
    # L2-normalize in f32 for accuracy, then cast operands to matmul_dtype.
    q_n = _l2_normalize(query_embeds.astype(jnp.float32))      # (Q, d)
    pos_n = _l2_normalize(pos_target_embeds.astype(jnp.float32))  # (Q, d)
    neg_n = _l2_normalize(neg_target_embeds.astype(jnp.float32))  # (N, d)
    rel = relation_embeds.astype(jnp.float32)                   # (Q, d)

    # Positive scores are O(Q*d): compute outside the tiled kernel.
    pos_scores = -jnp.sum(q_n * rel * pos_n, axis=-1)           # (Q,) f32

    # lhs shared by all N tiles; neg pre-normalized + pre-transposed so the
    # kernel is a standard (M,K)x(K,N) MXU contraction.
    lhs = (q_n * rel).astype(matmul_dtype)                      # (Q, d)
    neg_t = neg_n.T.astype(matmul_dtype)                        # (d, N)

    # --- Tiling: sublane-aligned on Q, 128-lane-aligned on N ----------------
    tq = min(tq, _round_up(Q, 8))
    tn = min(tn, _round_up(N, 128))
    Qp = _round_up(Q, tq)
    Np = _round_up(N, tn)

    lhs = jnp.pad(lhs, ((0, Qp - Q), (0, 0)))
    neg_t = jnp.pad(neg_t, ((0, 0), (0, Np - N)))

    grid = (Qp // tq, Np // tn)

    ib = jnp.dtype(matmul_dtype).itemsize
    ob = jnp.dtype(out_dtype).itemsize
    cost = pl.CostEstimate(
        flops=2 * Qp * Np * d,
        transcendentals=0,
        # lhs fetched once per Q tile, neg re-streamed once per Q tile,
        # plus the (Qp, Np) score writeback (the dominant term).
        bytes_accessed=Qp * d * ib + (Qp // tq) * Np * d * ib + Qp * Np * ob,
    )

    neg_scores = pl.pallas_call(
        distmult_neg_kernel,
        out_shape=jax.ShapeDtypeStruct((Qp, Np), out_dtype),
        grid=grid,
        in_specs=[
            pl.BlockSpec((tq, d), lambda i, j: (i, 0)),   # lhs = norm(q)*rel
            pl.BlockSpec((d, tn), lambda i, j: (0, j)),   # norm(neg)^T
        ],
        out_specs=pl.BlockSpec((tq, tn), lambda i, j: (i, j)),
        compiler_params=pltpu.CompilerParams(
            # No cross-iteration residency -> both axes parallel (v7x 2 TCs).
            dimension_semantics=("parallel", "parallel"),
            # Raise v5e's 16 MiB default scoped limit; safe on v6e/v7x too
            # (worst-case f32 double-buffered footprint ~11 MiB at 512x2048).
            vmem_limit_bytes=32 * 1024 * 1024,
        ),
        cost_estimate=cost,
    )(lhs, neg_t)

    return pos_scores, neg_scores[:Q, :N]


@functools.partial(
    jax.jit,
    static_argnames=("add_batch_to_negs", "matmul_dtype", "out_dtype"))
def distmult_forward(relation_vector, query_embeds, pos_target_embeds,
                     neg_target_embeds, r_type, is_head_prediction,
                     add_batch_to_negs=False,
                     matmul_dtype=jnp.bfloat16, out_dtype=jnp.bfloat16):
    # Glue: tiny embedding-table gather + optional pos-as-neg concatenation.
    # TODO(synk): the gather could move in-kernel via scalar prefetch; the
    # table is tiny so it stays in plain JAX.
    relation_embeds = jnp.take(relation_vector, r_type, axis=0)   # (Q, d)
    if add_batch_to_negs:
        neg_target_embeds = jnp.concatenate(
            [neg_target_embeds, pos_target_embeds], axis=0)

    # is_head_prediction is intentionally unused: DistMult's elementwise
    # triple product is symmetric in head/tail, so the selects cancel exactly
    # (validated against the where-select reference below).
    del is_head_prediction

    return distmult_scores(query_embeds, pos_target_embeds, neg_target_embeds,
                           relation_embeds, matmul_dtype=matmul_dtype,
                           out_dtype=out_dtype)


def xavier_uniform(key, shape, dtype=jnp.float32):
    fan_in, fan_out = shape[1], shape[0]
    limit = float(np.sqrt(6.0 / (fan_in + fan_out)))
    return jax.random.uniform(key, shape, dtype, minval=-limit, maxval=limit)


class DistMultDecoder:
    """JAX/Pallas port of the PyTorch DistMultDecoder."""

    def __init__(self, num_relations: int, embed_dim: int,
                 distance_norm: int = 1, *, key,
                 matmul_dtype=jnp.bfloat16, out_dtype=jnp.bfloat16):
        # distance_norm is unused by distance() in the original module; kept
        # for signature parity.
        self.distance_norm = distance_norm
        self.relation_vector = xavier_uniform(key, (num_relations, embed_dim))
        # bf16 operands/output by default (f32 MXU accumulation). Use
        # matmul_dtype=out_dtype=jnp.float32 when strict f32 scores are needed.
        self.matmul_dtype = matmul_dtype
        self.out_dtype = out_dtype

    def __call__(self, query_embeds, pos_target_embeds, neg_target_embeds,
                 r_type, is_head_prediction, add_batch_to_negs=False):
        return distmult_forward(
            self.relation_vector, query_embeds, pos_target_embeds,
            neg_target_embeds, r_type, is_head_prediction,
            add_batch_to_negs=add_batch_to_negs,
            matmul_dtype=self.matmul_dtype, out_dtype=self.out_dtype)


def _reference(query, pos, neg, rel, is_head, add_batch_to_negs=False):
    """Pure-JAX reference mirroring the PyTorch forward (mask + broadcast)."""
    if add_batch_to_negs:
        neg = jnp.concatenate([neg, pos], axis=0)
    mask2 = is_head.reshape(-1, 1)
    head = jnp.where(mask2, pos, query)
    tail = jnp.where(mask2, query, pos)

    def norm(x):
        n = jnp.sqrt(jnp.sum(x * x, axis=-1, keepdims=True))
        return x / jnp.maximum(n, 1e-12)

    pos_d = jnp.sum(norm(head) * rel * norm(tail), axis=-1)
    Q, d = query.shape
    N = neg.shape[0]
    neg_b = jnp.broadcast_to(neg[None], (Q, N, d))
    q_b = jnp.broadcast_to(query[:, None], (Q, N, d))
    m3 = mask2[:, :, None]
    nh = jnp.where(m3, neg_b, q_b)
    nt = jnp.where(m3, q_b, neg_b)
    neg_d = jnp.sum(norm(nh) * rel[:, None, :] * norm(nt), axis=-1)
    return -pos_d, -neg_d


if __name__ == "__main__":
    key = jax.random.PRNGKey(0)
    k_rel, k_q, k_pos, k_neg, k_rt, k_head = jax.random.split(key, 6)

    NUM_RELATIONS = 11
    EMBED_DIM = 128
    Q = 8
    NUM_NEGS = 16

    query_embeds = jax.random.normal(k_q, (Q, EMBED_DIM), jnp.float32)
    pos_target_embeds = jax.random.normal(k_pos, (Q, EMBED_DIM), jnp.float32)
    neg_target_embeds = jax.random.normal(k_neg, (NUM_NEGS, EMBED_DIM), jnp.float32)
    r_type = jax.random.randint(k_rt, (Q,), 0, NUM_RELATIONS, jnp.int32)
    is_head_prediction = jax.random.bernoulli(k_head, 0.5, (Q,))

    # Strict-precision decoder (f32 path) and fast default decoder (bf16 path)
    # share the same weights (same init key).
    dec_f32 = DistMultDecoder(NUM_RELATIONS, EMBED_DIM, distance_norm=1,
                              key=k_rel, matmul_dtype=jnp.float32,
                              out_dtype=jnp.float32)
    dec_bf16 = DistMultDecoder(NUM_RELATIONS, EMBED_DIM, distance_norm=1,
                               key=k_rel)  # bf16 defaults

    rel_embeds = jnp.take(dec_f32.relation_vector, r_type, axis=0)

    for add_negs in (False, True):
        ref_pos, ref_neg = _reference(query_embeds, pos_target_embeds,
                                      neg_target_embeds, rel_embeds,
                                      is_head_prediction, add_negs)
        n_total = NUM_NEGS + (Q if add_negs else 0)

        # --- f32 path: strict tolerance ---------------------------------
        pos_s, neg_s = dec_f32(query_embeds, pos_target_embeds,
                               neg_target_embeds, r_type,
                               is_head_prediction, add_negs)
        jax.block_until_ready((pos_s, neg_s))
        assert pos_s.shape == (Q,)
        assert neg_s.shape == (Q, n_total)
        np.testing.assert_allclose(np.asarray(pos_s), np.asarray(ref_pos),
                                   rtol=1e-5, atol=1e-5)
        np.testing.assert_allclose(np.asarray(neg_s), np.asarray(ref_neg),
                                   rtol=1e-5, atol=1e-5)

        # --- bf16 path (default): loosened tolerance ---------------------
        pos_b, neg_b = dec_bf16(query_embeds, pos_target_embeds,
                                neg_target_embeds, r_type,
                                is_head_prediction, add_negs)
        jax.block_until_ready((pos_b, neg_b))
        assert neg_b.dtype == jnp.bfloat16
        assert neg_b.shape == (Q, n_total)
        np.testing.assert_allclose(np.asarray(pos_b.astype(jnp.float32)),
                                   np.asarray(ref_pos), rtol=2e-2, atol=2e-2)
        np.testing.assert_allclose(np.asarray(neg_b.astype(jnp.float32)),
                                   np.asarray(ref_neg), rtol=2e-2, atol=2e-2)

    print("KERNEL_OK")
</pallas_src>

<mosaic_0001>
module attributes {stable_mosaic.version = 11 : i64} {
  func.func @distmult_neg_kernel(%arg0: i32, %arg1: i32, %arg2: memref<8x128xf32, #tpu.memory_space<vmem>>, %arg3: memref<128x128xf32, #tpu.memory_space<vmem>>, %arg4: memref<8x128xf32, #tpu.memory_space<vmem>>) attributes {dimension_semantics = [#tpu.dimension_semantics<parallel>, #tpu.dimension_semantics<parallel>], iteration_bounds = array<i64: 1, 1>, scalar_prefetch = 0 : i64, scratch_operands = 0 : i64, tpu.core_type = #tpu.core_type<tc>, window_params = [{transform_indices = @transform_0, window_bounds = array<i64: 8, 128>}, {transform_indices = @transform_1, window_bounds = array<i64: 128, 128>}, {transform_indices = @transform_2, window_bounds = array<i64: 8, 128>}]} {
    %c0 = arith.constant 0 : index
    %c0_0 = arith.constant 0 : index
    %0 = vector.load %arg2[%c0, %c0_0] : memref<8x128xf32, #tpu.memory_space<vmem>>, vector<8x128xf32>
    %c0_1 = arith.constant 0 : index
    %c0_2 = arith.constant 0 : index
    %1 = vector.load %arg3[%c0_1, %c0_2] : memref<128x128xf32, #tpu.memory_space<vmem>>, vector<128x128xf32>
    %cst = arith.constant dense<0.000000e+00> : vector<8x128xf32>
    %2 = tpu.matmul %0, %1, %cst {dimension_numbers = #tpu.dot_dimension_numbers<[1], [0], [0], [1], [0, 0, 1, 1], [], []>} : vector<8x128xf32>, vector<128x128xf32>, vector<8x128xf32> -> vector<8x128xf32>
    %cst_3 = arith.constant 0.000000e+00 : f32
    %3 = vector.broadcast %cst_3 : f32 to vector<8x128xf32>
    %4 = arith.subf %3, %2 : vector<8x128xf32>
    %c0_4 = arith.constant 0 : index
    %c0_5 = arith.constant 0 : index
    %5 = vector.load %arg4[%c0_4, %c0_5] : memref<8x128xf32, #tpu.memory_space<vmem>>, vector<8x128xf32>
    tpu.vector_store %arg4[%c0_4, %c0_5], %4 {strides = array<i32>} : memref<8x128xf32, #tpu.memory_space<vmem>>, vector<8x128xf32>,
    return
  }
  func.func @transform_0(%arg0: i32, %arg1: i32) -> (i32, i32) {
    %c0_i32 = arith.constant 0 : i32
    %c0_i32_0 = arith.constant 0 : i32
    return %arg0, %c0_i32 : i32, i32
  }
  func.func @transform_1(%arg0: i32, %arg1: i32) -> (i32, i32) {
    %c0_i32 = arith.constant 0 : i32
    %c0_i32_0 = arith.constant 0 : i32
    return %c0_i32, %arg1 : i32, i32
  }
  func.func @transform_2(%arg0: i32, %arg1: i32) -> (i32, i32) {
    %c0_i32 = arith.constant 0 : i32
    return %arg0, %arg1 : i32, i32
  }
}

</mosaic_0001>

<llo_original>
// kernel: neg.1
$region0: #{neg.1}
  #allocation2 [shape = 's32[1]{0}', space=sflag, size = 0x4, scoped, tag = 'scoped memory for neg.1']
  %s0 = inlined_call_operand.vmem [shape: f32[8], index: 0, kind: input, shape index: {}]
  %s1 = inlined_call_operand.hbm [shape: f32[8], index: 1, kind: output, shape index: {}]
  $region1: #{neg.1} parent=0
    #allocation0 [shape = 'u8[512]{0}', space=vmem, size = 0x400, scoped, tag = 'operand span for operand 1']
    #allocation1 [shape = 's32[1]{0}', space=sflag, size = 0x4, scoped, tag = 'scoped memory for neg.1']
    %2 = vsyncpa [#allocation1], 0
    %v3 = vld [vmem:[%s0] sm:$0x1]
    %4 = xla_tuple %v3
    %5 = xla_tuple %4
    %v6 = vxor.u32 %v3, 2147483648
    %7 = xla_tuple %v6
    %8 = vst [vmem:[#allocation0] sm:$0x1] %v6
    %10 = vsyncadd [#allocation1], 0
    %s12 = sshll.u32 [#allocation0], 4
    %s13 = int_to_ptr.vmem [resolvable:$true] %s12
    %s14 = sshll.u32 %s1, 4
    %s15 = int_to_ptr.hbm [resolvable:$true] %s14
    %17 = dma.vmem_to_hbm [thread:$0]  %s13, 16, %s15, [#allocation1]
    %19 = dma.done [#allocation1], 16
    %20 = vsyncpa [#allocation1], 1

// kernel: distmult_forward.1
$region0: #{distmult_forward.1}
  #allocation0 [shape = 'u32[]', space=smem, size = 0x4, offset = 0x4, fixed_abs, tag = 'smem constant byte address 0x4 - core index']
  #allocation1 [shape = 'u32[72,128]{1,0:T(1,128)}', space=vmem, size = 0x9000, scoped, tag = 'internal scratch']
  %s0 = inlined_call_operand.vmem [shape: f32[8,128], index: 0, kind: input, shape index: {}]
  %s1 = inlined_call_operand.vmem [shape: f32[128,128], index: 1, kind: input, shape index: {}]
  %s2 = inlined_call_operand.hbm [shape: f32[8,128], index: 2, kind: output, shape index: {}]
  %s3 = sld [smem:[#allocation0]]
  $region18: #{distmult_forward.1} parent=0
    _
  %s5 = ssub.s32 1, %s3
  %s6 = scalar_select 0, %s5, %s3
  $region1: #{distmult_forward.1} parent=0
    #allocation2 [shape = 'u8[4096]{0}', space=vmem, size = 0x1000, scoped, tag = 'output window, operand 0, single buffered']
    #allocation3 [shape = 's32[1]{0}', space=sflag, size = 0x4, scoped, tag = 'scoped memory for distmult_forward.1']
    %7 = vsyncpa [#allocation3], 0
    // Predicated region
    $region2: #{distmult_forward.1} parent=1 // pred_check
      _
    $region3: #{distmult_forward.1} parent=1 // pred_check_branch
      %9 = sbr.rel (0) target = $region5
    $region4: #{distmult_forward.1} parent=1 // pred_region
      _
    $region5: #{distmult_forward.1} parent=1 // pred_fallthru
      _
    // Predicated region
    $region6: #{distmult_forward.1} parent=1 // pred_check
      _
    $region7: #{distmult_forward.1} parent=1 // pred_check_branch
      %11 = sbr.rel (0) target = $region9
    $region8: #{distmult_forward.1} parent=1 // pred_region
      _
    $region9: #{distmult_forward.1} parent=1 // pred_fallthru
      _
    %v12 = vld [vmem:[%s0] sm:$0xff]
    %v13 = vld [vmem:[%s1] sm:$0xff]
    %v14 = vld [vmem:[%s1 + $0x8] sm:$0xff]
    %v15 = vld [vmem:[%s1 + $0x10] sm:$0xff]
    %v16 = vld [vmem:[%s1 + $0x18] sm:$0xff]
    %v17 = vld [vmem:[%s1 + $0x20] sm:$0xff]
    %v18 = vld [vmem:[%s1 + $0x28] sm:$0xff]
    %v19 = vld [vmem:[%s1 + $0x30] sm:$0xff]
    %v20 = vld [vmem:[%s1 + $0x38] sm:$0xff]
    %v21 = vld [vmem:[%s1 + $0x40] sm:$0xff]
    %v22 = vld [vmem:[%s1 + $0x48] sm:$0xff]
    %v23 = vld [vmem:[%s1 + $0x50] sm:$0xff]
    %v24 = vld [vmem:[%s1 + $0x58] sm:$0xff]
    %v25 = vld [vmem:[%s1 + $0x60] sm:$0xff]
    %v26 = vld [vmem:[%s1 + $0x68] sm:$0xff]
    %v27 = vld [vmem:[%s1 + $0x70] sm:$0xff]
    %v28 = vld [vmem:[%s1 + $0x78] sm:$0xff]
    %29 = vmatpush.msra.mxu0 %v28
    %30 = vmatpush.msra.mxu0 %v27
    %31 = vmatpush.msra.mxu0 %v26
    %32 = vmatpush.msra.mxu0 %v25
    %33 = vmatpush.msra.mxu0 %v24
    %34 = vmatpush.msra.mxu0 %v23
    %35 = vmatpush.msra.mxu0 %v22
    %36 = vmatpush.msra.mxu0 %v21
    %37 = vmatpush.msra.mxu0 %v20
    %38 = vmatpush.msra.mxu0 %v19
    %39 = vmatpush.msra.mxu0 %v18
    %40 = vmatpush.msra.mxu0 %v17
    %41 = vmatpush.msra.mxu0 %v16
    %42 = vmatpush.msra.mxu0 %v15
    %43 = vmatpush.msra.mxu0 %v14
    %44 = vmatpush.msra.mxu0 %v13
    %45 = vmatmul.f32.gmra.mxu0 %v12
    %v46 = vpop.f32.mrf.mxu0
    %v47 = vadd.f32 0.0, %v46
    %48 = vdwg.mxu0
    %v49 = vsub.f32 0.0, %v47
    %50 = vst [vmem:[#allocation2] sm:$0xff] %v49
    // Predicated region
    $region10: #{distmult_forward.1} parent=1 // pred_check
      _
    $region11: #{distmult_forward.1} parent=1 // pred_check_branch
      %52 = sbr.rel (0) target = $region13
    $region12: #{distmult_forward.1} parent=1 // pred_region
      %54 = vsyncadd [#allocation3], 0
      %s56 = sshll.u32 [#allocation2], 4
      %s57 = int_to_ptr.vmem [resolvable:$true] %s56
      %s58 = sshll.u32 %s2, 4
      %s59 = int_to_ptr.hbm [resolvable:$true] %s58
      %61 = dma.vmem_to_hbm [thread:$0]  %s57, 128, %s59, [#allocation3]
    $region13: #{distmult_forward.1} parent=1 // pred_fallthru
      _
    // Predicated region
    $region14: #{distmult_forward.1} parent=1 // pred_check
      _
    $region15: #{distmult_forward.1} parent=1 // pred_check_branch
      %63 = sbr.rel (0) target = $region17
    $region16: #{distmult_forward.1} parent=1 // pred_region
      %65 = dma.done [#allocation3], 128
    $region17: #{distmult_forward.1} parent=1 // pred_fallthru
      _
    %66 = vsyncpa [#allocation3], 1

</llo_original>
